<compile_context>
chip_gen: v6e
topology: v6e:2x2x1
jax: 0.10.0
libtpu: 0.0.40
codegen_flags: <defaults>
</compile_context>

<pallas_src>
import jax
import jax.numpy as jnp
from jax.experimental import pallas as pl
from jax.experimental.pallas import tpu as pltpu

N_EMBED = 128
HIDDEN = 4 * N_EMBED


def _round_up(x, m):
    return (x + m - 1) // m * m


def ff_kernel(x_ref, w1_ref, b1_ref, w2_ref, b2_ref, o_ref):
    # x_ref: (tm, C) row tile; w1/w2 bf16 (VMEM-resident); b1/b2 f32.
    x = x_ref[...]
    # MXU matmuls: bf16 operands, f32 accumulation.
    h = jnp.dot(x.astype(jnp.bfloat16), w1_ref[...],
                preferred_element_type=jnp.float32)            # (tm, 4C) f32
    h = jnp.maximum(h + b1_ref[...], 0.0)                      # bias + ReLU in f32
    y = jnp.dot(h.astype(jnp.bfloat16), w2_ref[...],
                preferred_element_type=jnp.float32)            # (tm, C) f32
    o_ref[...] = (y + b2_ref[...]).astype(o_ref.dtype)
    # nn.Dropout(0.2) is identity in eval/inference mode.


def feed_forward(x, params, *, max_tile_m=1024, out_dtype=None):
    """FeedForward forward: ReLU(x @ W1 + b1) @ W2 + b2 (dropout = identity)."""
    w1, b1, w2, b2 = params
    B, T, C = x.shape
    H = w1.shape[1]
    M = B * T
    out_dtype = x.dtype if out_dtype is None else out_dtype

    # Flatten tokens -> rows; the op is purely per-token so any row tiling is valid.
    xf = x.reshape(M, C)

    # Grid first, then tile: never forces extra grid steps for small M and never
    # inflates padding by more than (grid*8 - 1) rows.
    grid = pl.cdiv(M, max_tile_m)
    tm = _round_up(pl.cdiv(M, grid), 8)
    Mp = grid * tm
    if Mp != M:
        xf = jnp.pad(xf, ((0, Mp - M), (0, 0)))  # zero rows are sliced off below

    # Pre-cast weights to bf16 once (halves weight DMA, matches MXU fast path).
    w1b = w1.astype(jnp.bfloat16)
    w2b = w2.astype(jnp.bfloat16)

    # Grid-invariant operands: DMA'd once, kept resident, single-buffered.
    const = lambda shape: pl.BlockSpec(shape, lambda i: (0, 0),
                                       pipeline_mode=pl.Buffered(1))

    out = pl.pallas_call(
        ff_kernel,
        out_shape=jax.ShapeDtypeStruct((Mp, C), out_dtype),
        grid_spec=pltpu.PrefetchScalarGridSpec(
            num_scalar_prefetch=0,
            grid=(grid,),
            in_specs=[
                pl.BlockSpec((tm, C), lambda i: (i, 0)),  # x row tile
                const((C, H)),                            # W1 (bf16)
                const((1, H)),                            # b1 (f32)
                const((H, C)),                            # W2 (bf16)
                const((1, C)),                            # b2 (f32)
            ],
            out_specs=pl.BlockSpec((tm, C), lambda i: (i, 0)),
        ),
        compiler_params=pltpu.CompilerParams(
            dimension_semantics=("parallel",)),
    )(xf, w1b, b1, w2b, b2)
    return out[:M].reshape(B, T, C)


def reference_ff(x, params):
    w1, b1, w2, b2 = params
    h = jnp.maximum(x @ w1 + b1[0], 0.0)
    return h @ w2 + b2[0]


def init_params(key, c=N_EMBED):
    k1, k2 = jax.random.split(key)
    s = 0.02
    return (
        s * jax.random.normal(k1, (c, 4 * c), jnp.float32),   # W1 = Linear(c, 4c).weight.T
        jnp.zeros((1, 4 * c), jnp.float32),                    # b1
        s * jax.random.normal(k2, (4 * c, c), jnp.float32),    # W2 = Linear(4c, c).weight.T
        jnp.zeros((1, c), jnp.float32),                         # b2
    )


if __name__ == "__main__":
    key = jax.random.PRNGKey(0)
    kx, kp = jax.random.split(key)
    B, T, C = 2, 16, N_EMBED
    x = jax.random.normal(kx, (B, T, C), jnp.float32)
    params = init_params(kp)

    out = jax.block_until_ready(feed_forward(x, params))
    ref = reference_ff(x, params)

    assert out.shape == (B, T, C)
    # bf16 matmul operands with f32 accumulation -> loose-but-safe tolerance vs f32 ref.
    err = float(jnp.max(jnp.abs(out - ref)))
    assert jnp.allclose(out, ref, atol=1e-2, rtol=1e-2), f"mismatch vs reference, max abs err {err}"
    print("KERNEL_OK")
</pallas_src>

<mosaic_0001>
module attributes {stable_mosaic.version = 11 : i64} {
  func.func @ff_kernel(%arg0: i32, %arg1: memref<32x128xf32, #tpu.memory_space<vmem>>, %arg2: memref<128x512xbf16, #tpu.memory_space<vmem>>, %arg3: memref<1x512xf32, #tpu.memory_space<vmem>>, %arg4: memref<512x128xbf16, #tpu.memory_space<vmem>>, %arg5: memref<1x128xf32, #tpu.memory_space<vmem>>, %arg6: memref<32x128xf32, #tpu.memory_space<vmem>>) attributes {dimension_semantics = [#tpu.dimension_semantics<parallel>], iteration_bounds = array<i64: 1>, scalar_prefetch = 0 : i64, scratch_operands = 0 : i64, tpu.core_type = #tpu.core_type<tc>, window_params = [{transform_indices = @transform_0, window_bounds = array<i64: 32, 128>}, {pipeline_mode = #tpu.pipeline_mode<synchronous>, transform_indices = @transform_1, window_bounds = array<i64: 128, 512>}, {pipeline_mode = #tpu.pipeline_mode<synchronous>, transform_indices = @transform_2, window_bounds = array<i64: 1, 512>}, {pipeline_mode = #tpu.pipeline_mode<synchronous>, transform_indices = @transform_3, window_bounds = array<i64: 512, 128>}, {pipeline_mode = #tpu.pipeline_mode<synchronous>, transform_indices = @transform_4, window_bounds = array<i64: 1, 128>}, {transform_indices = @transform_5, window_bounds = array<i64: 32, 128>}]} {
    %c0 = arith.constant 0 : index
    %c0_0 = arith.constant 0 : index
    %0 = vector.load %arg1[%c0, %c0_0] : memref<32x128xf32, #tpu.memory_space<vmem>>, vector<32x128xf32>
    %1 = arith.truncf %0 : vector<32x128xf32> to vector<32x128xbf16>
    %c0_1 = arith.constant 0 : index
    %c0_2 = arith.constant 0 : index
    %2 = vector.load %arg2[%c0_1, %c0_2] : memref<128x512xbf16, #tpu.memory_space<vmem>>, vector<128x512xbf16>
    %cst = arith.constant dense<0.000000e+00> : vector<32x512xf32>
    %3 = tpu.matmul %1, %2, %cst {dimension_numbers = #tpu.dot_dimension_numbers<[1], [0], [0], [1], [0, 0, 1, 1], [], []>} : vector<32x128xbf16>, vector<128x512xbf16>, vector<32x512xf32> -> vector<32x512xf32>
    %c0_3 = arith.constant 0 : index
    %c0_4 = arith.constant 0 : index
    %4 = vector.load %arg3[%c0_3, %c0_4] : memref<1x512xf32, #tpu.memory_space<vmem>>, vector<1x512xf32>
    %5 = vector.broadcast %4 : vector<1x512xf32> to vector<32x512xf32>
    %6 = arith.addf %3, %5 : vector<32x512xf32>
    %cst_5 = arith.constant 0.000000e+00 : f32
    %7 = vector.broadcast %cst_5 : f32 to vector<32x512xf32>
    %8 = arith.maximumf %6, %7 : vector<32x512xf32>
    %9 = arith.truncf %8 : vector<32x512xf32> to vector<32x512xbf16>
    %c0_6 = arith.constant 0 : index
    %c0_7 = arith.constant 0 : index
    %10 = vector.load %arg4[%c0_6, %c0_7] : memref<512x128xbf16, #tpu.memory_space<vmem>>, vector<512x128xbf16>
    %cst_8 = arith.constant dense<0.000000e+00> : vector<32x128xf32>
    %11 = tpu.matmul %9, %10, %cst_8 {dimension_numbers = #tpu.dot_dimension_numbers<[1], [0], [0], [1], [0, 0, 1, 1], [], []>} : vector<32x512xbf16>, vector<512x128xbf16>, vector<32x128xf32> -> vector<32x128xf32>
    %c0_9 = arith.constant 0 : index
    %c0_10 = arith.constant 0 : index
    %12 = vector.load %arg5[%c0_9, %c0_10] : memref<1x128xf32, #tpu.memory_space<vmem>>, vector<1x128xf32>
    %13 = vector.broadcast %12 : vector<1x128xf32> to vector<32x128xf32>
    %14 = arith.addf %11, %13 : vector<32x128xf32>
    %c0_11 = arith.constant 0 : index
    %c0_12 = arith.constant 0 : index
    %15 = vector.load %arg6[%c0_11, %c0_12] : memref<32x128xf32, #tpu.memory_space<vmem>>, vector<32x128xf32>
    tpu.vector_store %arg6[%c0_11, %c0_12], %14 {strides = array<i32>} : memref<32x128xf32, #tpu.memory_space<vmem>>, vector<32x128xf32>,
    return
  }
  func.func @transform_0(%arg0: i32) -> (i32, i32) {
    %c0_i32 = arith.constant 0 : i32
    %c0_i32_0 = arith.constant 0 : i32
    return %arg0, %c0_i32 : i32, i32
  }
  func.func @transform_1(%arg0: i32) -> (i32, i32) {
    %c0_i32 = arith.constant 0 : i32
    %c0_i32_0 = arith.constant 0 : i32
    %c0_i32_1 = arith.constant 0 : i32
    return %c0_i32, %c0_i32_0 : i32, i32
  }
  func.func @transform_2(%arg0: i32) -> (i32, i32) {
    %c0_i32 = arith.constant 0 : i32
    %c0_i32_0 = arith.constant 0 : i32
    %c0_i32_1 = arith.constant 0 : i32
    return %c0_i32, %c0_i32_0 : i32, i32
  }
  func.func @transform_3(%arg0: i32) -> (i32, i32) {
    %c0_i32 = arith.constant 0 : i32
    %c0_i32_0 = arith.constant 0 : i32
    %c0_i32_1 = arith.constant 0 : i32
    return %c0_i32, %c0_i32_0 : i32, i32
  }
  func.func @transform_4(%arg0: i32) -> (i32, i32) {
    %c0_i32 = arith.constant 0 : i32
    %c0_i32_0 = arith.constant 0 : i32
    %c0_i32_1 = arith.constant 0 : i32
    return %c0_i32, %c0_i32_0 : i32, i32
  }
  func.func @transform_5(%arg0: i32) -> (i32, i32) {
    %c0_i32 = arith.constant 0 : i32
    %c0_i32_0 = arith.constant 0 : i32
    return %arg0, %c0_i32 : i32, i32
  }
}

</mosaic_0001>

<llo_original>
// kernel: tpu_custom_call.1
$region0: #{tpu_custom_call.1}
  #allocation0 [shape = 'u32[]', space=smem, size = 0x4, offset = 0x4, fixed_abs, tag = 'smem constant byte address 0x4 - core index']
  #allocation1 [shape = 'u32[144,128]{1,0:T(1,128)}', space=vmem, size = 0x12000, scoped, tag = 'internal scratch']
  %s0 = inlined_call_operand.hbm [shape: f32[32,128], index: 0, kind: input, shape index: {}]
  %s1 = inlined_call_operand.hbm [shape: bf16[128,512], index: 1, kind: input, shape index: {}]
  %s2 = inlined_call_operand.hbm [shape: f32[1,512], index: 2, kind: input, shape index: {}]
  %s3 = inlined_call_operand.hbm [shape: bf16[512,128], index: 3, kind: input, shape index: {}]
  %s4 = inlined_call_operand.vmem [shape: f32[1,128], index: 4, kind: input, shape index: {}]
  %s5 = inlined_call_operand.hbm [shape: f32[32,128], index: 5, kind: output, shape index: {}]
  %s6 = sld [smem:[#allocation0]]
  $region46: #{tpu_custom_call.1} parent=0
    _
  %s8 = ssub.s32 1, %s6
  %s9 = scalar_select 0, %s8, %s6
  $region1: #{tpu_custom_call.1} parent=0
    #allocation2 [shape = 'u8[16384]{0}', space=vmem, size = 0x4000, scoped, tag = 'input window, operand 0, single buffered']
    #allocation3 [shape = 's32[1]{0}', space=sflag, size = 0x4, scoped, tag = 'scoped memory for tpu_custom_call.1']
    #allocation4 [shape = 's32[1]{0}', space=sflag, size = 0x4, scoped, tag = 'scoped memory for tpu_custom_call.1']
    #allocation5 [shape = 'u8[131072]{0}', space=vmem, size = 0x20000, scoped, tag = 'input window, operand 1, single buffered']
    #allocation6 [shape = 's32[1]{0}', space=sflag, size = 0x4, scoped, tag = 'scoped memory for tpu_custom_call.1']
    #allocation7 [shape = 'u8[2048]{0}', space=vmem, size = 0x800, scoped, tag = 'input window, operand 2, single buffered']
    #allocation8 [shape = 'u8[131072]{0}', space=vmem, size = 0x20000, scoped, tag = 'input window, operand 3, single buffered']
    #allocation9 [shape = 's32[1]{0}', space=sflag, size = 0x4, scoped, tag = 'scoped memory for tpu_custom_call.1']
    #allocation10 [shape = 'u8[16384]{0}', space=vmem, size = 0x4000, scoped, tag = 'output window, operand 0, single buffered']
    %10 = vsyncpa [#allocation3], 0
    %11 = vsyncpa [#allocation6], 0
    %12 = vsyncpa [#allocation9], 0
    %13 = vsyncpa [#allocation4], 0
    // Predicated region
    $region2: #{tpu_custom_call.1} parent=1 // pred_check
      _
    $region3: #{tpu_custom_call.1} parent=1 // pred_check_branch
      %15 = sbr.rel (0) target = $region5
    $region4: #{tpu_custom_call.1} parent=1 // pred_region
      %s17 = ssub.s32 512, 512
      %18 = vsyncadd [#allocation3], %s17
      %s19 = sshll.u32 [#allocation2], 4
      %s20 = int_to_ptr.vmem [resolvable:$true] %s19
      %25 = dma.hbm_to_vmem [thread:$0]  %s0, 512, %s20, [#allocation3], 128, 128, 8
    $region5: #{tpu_custom_call.1} parent=1 // pred_fallthru
      _
    // Predicated region
    $region6: #{tpu_custom_call.1} parent=1 // pred_check
      _
    $region7: #{tpu_custom_call.1} parent=1 // pred_check_branch
      %27 = sbr.rel (0) target = $region9
    $region8: #{tpu_custom_call.1} parent=1 // pred_region
      %s29 = ssub.s32 4096, 4096
      %30 = vsyncadd [#allocation6], %s29
      %s31 = sshll.u32 [#allocation5], 4
      %s32 = int_to_ptr.vmem [resolvable:$true] %s31
      %37 = dma.hbm_to_vmem [thread:$0]  %s1, 4096, %s32, [#allocation6], 256, 256, 16
    $region9: #{tpu_custom_call.1} parent=1 // pred_fallthru
      _
    // Predicated region
    $region10: #{tpu_custom_call.1} parent=1 // pred_check
      _
    $region11: #{tpu_custom_call.1} parent=1 // pred_check_branch
      %39 = sbr.rel (0) target = $region13
    $region12: #{tpu_custom_call.1} parent=1 // pred_region
      %s41 = ssub.s32 64, 64
      %42 = vsyncadd [#allocation6], %s41
      %s44 = sshll.u32 [#allocation7], 4
      %s45 = int_to_ptr.vmem [resolvable:$true] %s44
      %47 = dma.hbm_to_vmem [thread:$0]  %s2, 64, %s45, [#allocation6]
    $region13: #{tpu_custom_call.1} parent=1 // pred_fallthru
      _
    // Predicated region
    $region14: #{tpu_custom_call.1} parent=1 // pred_check
      _
    $region15: #{tpu_custom_call.1} parent=1 // pred_check_branch
      %49 = sbr.rel (0) target = $region17
    $region16: #{tpu_custom_call.1} parent=1 // pred_region
      %s51 = ssub.s32 4096, 4096
      %52 = vsyncadd [#allocation9], %s51
      %s53 = sshll.u32 [#allocation8], 4
      %s54 = int_to_ptr.vmem [resolvable:$true] %s53
      %59 = dma.hbm_to_vmem [thread:$0]  %s3, 4096, %s54, [#allocation9], 64, 64, 4
    $region17: #{tpu_custom_call.1} parent=1 // pred_fallthru
      _
    // Predicated region
    $region18: #{tpu_custom_call.1} parent=1 // pred_check
      _
    $region19: #{tpu_custom_call.1} parent=1 // pred_check_branch
      %61 = sbr.rel (0) target = $region21
    $region20: #{tpu_custom_call.1} parent=1 // pred_region
      _
    $region21: #{tpu_custom_call.1} parent=1 // pred_fallthru
      _
    // Predicated region
    $region22: #{tpu_custom_call.1} parent=1 // pred_check
      _
    $region23: #{tpu_custom_call.1} parent=1 // pred_check_branch
      %63 = sbr.rel (0) target = $region25
    $region24: #{tpu_custom_call.1} parent=1 // pred_region
      %64 = dma.done [#allocation3], 512
    $region25: #{tpu_custom_call.1} parent=1 // pred_fallthru
      _
    // Predicated region
    $region26: #{tpu_custom_call.1} parent=1 // pred_check
      _
    $region27: #{tpu_custom_call.1} parent=1 // pred_check_branch
      %66 = sbr.rel (0) target = $region29
    $region28: #{tpu_custom_call.1} parent=1 // pred_region
      %67 = dma.done [#allocation6], 4096
    $region29: #{tpu_custom_call.1} parent=1 // pred_fallthru
      _
    // Predicated region
    $region30: #{tpu_custom_call.1} parent=1 // pred_check
      _
    $region31: #{tpu_custom_call.1} parent=1 // pred_check_branch
      %69 = sbr.rel (0) target = $region33
    $region32: #{tpu_custom_call.1} parent=1 // pred_region
      %70 = dma.done [#allocation6], 64
    $region33: #{tpu_custom_call.1} parent=1 // pred_fallthru
      _
    // Predicated region
    $region34: #{tpu_custom_call.1} parent=1 // pred_check
      _
    $region35: #{tpu_custom_call.1} parent=1 // pred_check_branch
      %72 = sbr.rel (0) target = $region37
    $region36: #{tpu_custom_call.1} parent=1 // pred_region
      %73 = dma.done [#allocation9], 4096
    $region37: #{tpu_custom_call.1} parent=1 // pred_fallthru
      _
    %v75 = vld [vmem:[#allocation2] sm:$0xff]
    %v76 = vld [vmem:[#allocation2 + $0x8] sm:$0xff]
    %v77 = vld [vmem:[#allocation2 + $0x10] sm:$0xff]
    %v78 = vld [vmem:[#allocation2 + $0x18] sm:$0xff]
    %v79 = vpack.c.bf16 %v76, %v75
    %v80 = vpack.c.bf16 %v78, %v77
    %v81 = vld [vmem:[#allocation5] sm:$0xff]
    %v82 = vld [vmem:[#allocation5 + $0x8] sm:$0xff]
    %v83 = vld [vmem:[#allocation5 + $0x10] sm:$0xff]
    %v84 = vld [vmem:[#allocation5 + $0x18] sm:$0xff]
    %v85 = vld [vmem:[#allocation5 + $0x20] sm:$0xff]
    %v86 = vld [vmem:[#allocation5 + $0x28] sm:$0xff]
    %v87 = vld [vmem:[#allocation5 + $0x30] sm:$0xff]
    %v88 = vld [vmem:[#allocation5 + $0x38] sm:$0xff]
    %v89 = vld [vmem:[#allocation5 + $0x40] sm:$0xff]
    %v90 = vld [vmem:[#allocation5 + $0x48] sm:$0xff]
    %v91 = vld [vmem:[#allocation5 + $0x50] sm:$0xff]
    %v92 = vld [vmem:[#allocation5 + $0x58] sm:$0xff]
    %v93 = vld [vmem:[#allocation5 + $0x60] sm:$0xff]
    %v94 = vld [vmem:[#allocation5 + $0x68] sm:$0xff]
    %v95 = vld [vmem:[#allocation5 + $0x70] sm:$0xff]
    %v96 = vld [vmem:[#allocation5 + $0x78] sm:$0xff]
    %v97 = vld [vmem:[#allocation5 + $0x80] sm:$0xff]
    %v98 = vld [vmem:[#allocation5 + $0x88] sm:$0xff]
    %v99 = vld [vmem:[#allocation5 + $0x90] sm:$0xff]
    %v100 = vld [vmem:[#allocation5 + $0x98] sm:$0xff]
    %v101 = vld [vmem:[#allocation5 + $0xa0] sm:$0xff]
    %v102 = vld [vmem:[#allocation5 + $0xa8] sm:$0xff]
    %v103 = vld [vmem:[#allocation5 + $0xb0] sm:$0xff]
    %v104 = vld [vmem:[#allocation5 + $0xb8] sm:$0xff]
    %v105 = vld [vmem:[#allocation5 + $0xc0] sm:$0xff]
    %v106 = vld [vmem:[#allocation5 + $0xc8] sm:$0xff]
    %v107 = vld [vmem:[#allocation5 + $0xd0] sm:$0xff]
    %v108 = vld [vmem:[#allocation5 + $0xd8] sm:$0xff]
    %v109 = vld [vmem:[#allocation5 + $0xe0] sm:$0xff]
    %v110 = vld [vmem:[#allocation5 + $0xe8] sm:$0xff]
    %v111 = vld [vmem:[#allocation5 + $0xf0] sm:$0xff]
    %v112 = vld [vmem:[#allocation5 + $0xf8] sm:$0xff]
    %v113 = vld [vmem:[#allocation7] sm:$0xf]
    %v115 = vlaneseq
    %v116 = vshrl.u32 %v115, 7
    %v117 = vsub.s32 0, %v116
    %v118 = vrot.slane %v113, %v117
    %v119 = vlaneseq
    %v120 = vshrl.u32 %v119, 7
    %v121 = vsub.s32 1, %v120
    %v122 = vrot.slane %v113, %v121
    %v123 = vlaneseq
    %v124 = vshrl.u32 %v123, 7
    %v125 = vsub.s32 2, %v124
    %v126 = vrot.slane %v113, %v125
    %v127 = vlaneseq
    %v128 = vshrl.u32 %v127, 7
    %v129 = vsub.s32 3, %v128
    %v130 = vrot.slane %v113, %v129
    %v167 = vunpack.c.l.b16 %v81
    %v168 = vunpack.c.h.b16 %v81
    %v169 = vunpack.c.l.b16 %v82
    %v170 = vunpack.c.h.b16 %v82
    %v171 = vunpack.c.l.b16 %v83
    %v172 = vunpack.c.h.b16 %v83
    %v173 = vunpack.c.l.b16 %v84
    %v174 = vunpack.c.h.b16 %v84
    %v175 = vunpack.c.l.b16 %v85
    %v176 = vunpack.c.h.b16 %v85
    %v177 = vunpack.c.l.b16 %v86
    %v178 = vunpack.c.h.b16 %v86
    %v179 = vunpack.c.l.b16 %v87
    %v180 = vunpack.c.h.b16 %v87
    %v181 = vunpack.c.l.b16 %v88
    %v182 = vunpack.c.h.b16 %v88
    %v183 = vunpack.c.l.b16 %v89
    %v184 = vunpack.c.h.b16 %v89
    %v185 = vunpack.c.l.b16 %v90
    %v186 = vunpack.c.h.b16 %v90
    %v187 = vunpack.c.l.b16 %v91
    %v188 = vunpack.c.h.b16 %v91
    %v189 = vunpack.c.l.b16 %v92
    %v190 = vunpack.c.h.b16 %v92
    %v191 = vunpack.c.l.b16 %v93
    %v192 = vunpack.c.h.b16 %v93
    %v193 = vunpack.c.l.b16 %v94
    %v194 = vunpack.c.h.b16 %v94
    %v195 = vunpack.c.l.b16 %v95
    %v196 = vunpack.c.h.b16 %v95
    %v197 = vunpack.c.l.b16 %v96
    %v198 = vunpack.c.h.b16 %v96
    %v199 = vunpack.c.l.b16 %v97
    %v200 = vunpack.c.h.b16 %v97
    %v201 = vunpack.c.l.b16 %v98
    %v202 = vunpack.c.h.b16 %v98
    %v203 = vunpack.c.l.b16 %v99
    %v204 = vunpack.c.h.b16 %v99
    %v205 = vunpack.c.l.b16 %v100
    %v206 = vunpack.c.h.b16 %v100
    %v207 = vunpack.c.l.b16 %v101
    %v208 = vunpack.c.h.b16 %v101
    %v209 = vunpack.c.l.b16 %v102
    %v210 = vunpack.c.h.b16 %v102
    %v211 = vunpack.c.l.b16 %v103
    %v212 = vunpack.c.h.b16 %v103
    %v213 = vunpack.c.l.b16 %v104
    %v214 = vunpack.c.h.b16 %v104
    %v215 = vunpack.c.l.b16 %v105
    %v216 = vunpack.c.h.b16 %v105
    %v217 = vunpack.c.l.b16 %v106
    %v218 = vunpack.c.h.b16 %v106
    %v219 = vunpack.c.l.b16 %v107
    %v220 = vunpack.c.h.b16 %v107
    %v221 = vunpack.c.l.b16 %v108
    %v222 = vunpack.c.h.b16 %v108
    %v223 = vunpack.c.l.b16 %v109
    %v224 = vunpack.c.h.b16 %v109
    %v225 = vunpack.c.l.b16 %v110
    %v226 = vunpack.c.h.b16 %v110
    %v227 = vunpack.c.l.b16 %v111
    %v228 = vunpack.c.h.b16 %v111
    %v229 = vunpack.c.l.b16 %v112
    %v230 = vunpack.c.h.b16 %v112
    %v231 = vpack.c.b16 %v171, %v167
    %v232 = vpack.c.b16 %v172, %v168
    %v233 = vpack.c.b16 %v173, %v169
    %v234 = vpack.c.b16 %v174, %v170
    %v235 = vpack.c.b16 %v179, %v175
    %v236 = vpack.c.b16 %v180, %v176
    %v237 = vpack.c.b16 %v181, %v177
    %v238 = vpack.c.b16 %v182, %v178
    %v239 = vpack.c.b16 %v187, %v183
    %v240 = vpack.c.b16 %v188, %v184
    %v241 = vpack.c.b16 %v189, %v185
    %v242 = vpack.c.b16 %v190, %v186
    %v243 = vpack.c.b16 %v195, %v191
    %v244 = vpack.c.b16 %v196, %v192
    %v245 = vpack.c.b16 %v197, %v193
    %v246 = vpack.c.b16 %v198, %v194
    %v247 = vpack.c.b16 %v203, %v199
    %v248 = vpack.c.b16 %v204, %v200
    %v249 = vpack.c.b16 %v205, %v201
    %v250 = vpack.c.b16 %v206, %v202
    %v251 = vpack.c.b16 %v211, %v207
    %v252 = vpack.c.b16 %v212, %v208
    %v253 = vpack.c.b16 %v213, %v209
    %v254 = vpack.c.b16 %v214, %v210
    %v255 = vpack.c.b16 %v219, %v215
    %v256 = vpack.c.b16 %v220, %v216
    %v257 = vpack.c.b16 %v221, %v217
    %v258 = vpack.c.b16 %v222, %v218
    %v259 = vpack.c.b16 %v227, %v223
    %v260 = vpack.c.b16 %v228, %v224
    %v261 = vpack.c.b16 %v229, %v225
    %v262 = vpack.c.b16 %v230, %v226
    %295 = vmatprep.subr.bf16.mxu0 %v260
    %296 = vmatpush1.bf16.msra.mxu0 %v259
    %297 = vmatprep.subr.bf16.mxu0 %v256
    %298 = vmatpush1.bf16.msra.mxu0 %v255
    %299 = vmatprep.subr.bf16.mxu0 %v252
    %300 = vmatpush1.bf16.msra.mxu0 %v251
    %301 = vmatprep.subr.bf16.mxu0 %v248
    %302 = vmatpush1.bf16.msra.mxu0 %v247
    %303 = vmatprep.subr.bf16.mxu0 %v244
    %304 = vmatpush1.bf16.msra.mxu0 %v243
    %305 = vmatprep.subr.bf16.mxu0 %v240
    %306 = vmatpush1.bf16.msra.mxu0 %v239
    %307 = vmatprep.subr.bf16.mxu0 %v236
    %308 = vmatpush1.bf16.msra.mxu0 %v235
    %309 = vmatprep.subr.bf16.mxu0 %v232
    %310 = vmatpush1.bf16.msra.mxu0 %v231
    %311 = vmatprep.subr.bf16.mxu0 0
    %312 = vmatpush2.bf16.msra.mxu0 0
    %313 = vmatprep.subr.bf16.mxu0 0
    %314 = vmatpush2.bf16.msra.mxu0 0
    %315 = vmatprep.subr.bf16.mxu0 0
    %316 = vmatpush2.bf16.msra.mxu0 0
    %317 = vmatprep.subr.bf16.mxu0 0
    %318 = vmatpush2.bf16.msra.mxu0 0
    %319 = vmatprep.subr.bf16.mxu0 0
    %320 = vmatpush2.bf16.msra.mxu0 0
    %321 = vmatprep.subr.bf16.mxu0 0
    %322 = vmatpush2.bf16.msra.mxu0 0
    %323 = vmatprep.subr.bf16.mxu0 0
    %324 = vmatpush2.bf16.msra.mxu0 0
    %325 = vmatprep.subr.bf16.mxu0 0
    %326 = vmatpush2.bf16.msra.mxu0 0
    %327 = vmatprep.mubr.bf16.mxu0 0
    %328 = vmatmul.mubr.bf16.gmra.mxu0 %v79
    %v329 = vpop.f32.mrf.mxu0
    %v330 = vadd.f32 %v118, %v329
    %v331 = vpop.f32.mrf.mxu0
    %v332 = vadd.f32 %v122, %v331
    %v333 = vpop.f32.mrf.mxu0
    %v334 = vadd.f32 %v118, %v333
    %v335 = vpop.f32.mrf.mxu0
    %v336 = vadd.f32 %v122, %v335
    %337 = vmatprep.mubr.bf16.mxu0 0
    %338 = vmatmul.mubr.bf16.gmra.mxu0 %v80
    %v339 = vpop.f32.mrf.mxu0
    %v340 = vadd.f32 %v118, %v339
    %v341 = vpop.f32.mrf.mxu0
    %v342 = vadd.f32 %v122, %v341
    %v343 = vpop.f32.mrf.mxu0
    %v344 = vadd.f32 %v118, %v343
    %v345 = vpop.f32.mrf.mxu0
    %v346 = vadd.f32 %v122, %v345
    %347 = vdwg.mxu0
    %348 = vmatprep.subr.bf16.mxu0 %v262
    %349 = vmatpush1.bf16.msra.mxu0 %v261
    %350 = vmatprep.subr.bf16.mxu0 %v258
    %351 = vmatpush1.bf16.msra.mxu0 %v257
    %352 = vmatprep.subr.bf16.mxu0 %v254
    %353 = vmatpush1.bf16.msra.mxu0 %v253
    %354 = vmatprep.subr.bf16.mxu0 %v250
    %355 = vmatpush1.bf16.msra.mxu0 %v249
    %356 = vmatprep.subr.bf16.mxu0 %v246
    %357 = vmatpush1.bf16.msra.mxu0 %v245
    %358 = vmatprep.subr.bf16.mxu0 %v242
    %359 = vmatpush1.bf16.msra.mxu0 %v241
    %360 = vmatprep.subr.bf16.mxu0 %v238
    %361 = vmatpush1.bf16.msra.mxu0 %v237
    %362 = vmatprep.subr.bf16.mxu0 %v234
    %363 = vmatpush1.bf16.msra.mxu0 %v233
    %364 = vmatprep.subr.bf16.mxu0 0
    %365 = vmatpush2.bf16.msra.mxu0 0
    %366 = vmatprep.subr.bf16.mxu0 0
    %367 = vmatpush2.bf16.msra.mxu0 0
    %368 = vmatprep.subr.bf16.mxu0 0
    %369 = vmatpush2.bf16.msra.mxu0 0
    %370 = vmatprep.subr.bf16.mxu0 0
    %371 = vmatpush2.bf16.msra.mxu0 0
    %372 = vmatprep.subr.bf16.mxu0 0
    %373 = vmatpush2.bf16.msra.mxu0 0
    %374 = vmatprep.subr.bf16.mxu0 0
    %375 = vmatpush2.bf16.msra.mxu0 0
    %376 = vmatprep.subr.bf16.mxu0 0
    %377 = vmatpush2.bf16.msra.mxu0 0
    %378 = vmatprep.subr.bf16.mxu0 0
    %379 = vmatpush2.bf16.msra.mxu0 0
    %380 = vmatprep.mubr.bf16.mxu0 0
    %381 = vmatmul.mubr.bf16.gmra.mxu0 %v79
    %v382 = vpop.f32.mrf.mxu0
    %v383 = vadd.f32 %v126, %v382
    %v384 = vpop.f32.mrf.mxu0
    %v385 = vadd.f32 %v130, %v384
    %v386 = vpop.f32.mrf.mxu0
    %v387 = vadd.f32 %v126, %v386
    %v388 = vpop.f32.mrf.mxu0
    %v389 = vadd.f32 %v130, %v388
    %390 = vmatprep.mubr.bf16.mxu0 0
    %391 = vmatmul.mubr.bf16.gmra.mxu0 %v80
    %v392 = vpop.f32.mrf.mxu0
    %v393 = vadd.f32 %v126, %v392
    %v394 = vpop.f32.mrf.mxu0
    %v395 = vadd.f32 %v130, %v394
    %v396 = vpop.f32.mrf.mxu0
    %v397 = vadd.f32 %v126, %v396
    %v398 = vpop.f32.mrf.mxu0
    %v399 = vadd.f32 %v130, %v398
    %400 = vdwg.mxu0
    %v401 = vmax.f32 %v330, 0.0
    %v402 = vmax.f32 %v332, 0.0
    %v403 = vmax.f32 %v383, 0.0
    %v404 = vmax.f32 %v385, 0.0
    %v405 = vmax.f32 %v334, 0.0
    %v406 = vmax.f32 %v336, 0.0
    %v407 = vmax.f32 %v387, 0.0
    %v408 = vmax.f32 %v389, 0.0
    %v409 = vmax.f32 %v340, 0.0
    %v410 = vmax.f32 %v342, 0.0
    %v411 = vmax.f32 %v393, 0.0
    %v412 = vmax.f32 %v395, 0.0
    %v413 = vmax.f32 %v344, 0.0
    %v414 = vmax.f32 %v346, 0.0
    %v415 = vmax.f32 %v397, 0.0
    %v416 = vmax.f32 %v399, 0.0
    %v417 = vpack.c.bf16 %v405, %v401
    %v418 = vpack.c.bf16 %v406, %v402
    %v419 = vpack.c.bf16 %v407, %v403
    %v420 = vpack.c.bf16 %v408, %v404
    %v421 = vpack.c.bf16 %v413, %v409
    %v422 = vpack.c.bf16 %v414, %v410
    %v423 = vpack.c.bf16 %v415, %v411
    %v424 = vpack.c.bf16 %v416, %v412
    %v425 = vld [vmem:[#allocation8] sm:$0xf]
    %v426 = vld [vmem:[#allocation8 + $0x4] sm:$0xf]
    %v427 = vld [vmem:[#allocation8 + $0x8] sm:$0xf]
    %v428 = vld [vmem:[#allocation8 + $0xc] sm:$0xf]
    %v429 = vld [vmem:[#allocation8 + $0x10] sm:$0xf]
    %v430 = vld [vmem:[#allocation8 + $0x14] sm:$0xf]
    %v431 = vld [vmem:[#allocation8 + $0x18] sm:$0xf]
    %v432 = vld [vmem:[#allocation8 + $0x1c] sm:$0xf]
    %v433 = vld [vmem:[#allocation8 + $0x20] sm:$0xf]
    %v434 = vld [vmem:[#allocation8 + $0x24] sm:$0xf]
    %v435 = vld [vmem:[#allocation8 + $0x28] sm:$0xf]
    %v436 = vld [vmem:[#allocation8 + $0x2c] sm:$0xf]
    %v437 = vld [vmem:[#allocation8 + $0x30] sm:$0xf]
    %v438 = vld [vmem:[#allocation8 + $0x34] sm:$0xf]
    %v439 = vld [vmem:[#allocation8 + $0x38] sm:$0xf]
    %v440 = vld [vmem:[#allocation8 + $0x3c] sm:$0xf]
    %v441 = vld [vmem:[#allocation8 + $0x40] sm:$0xf]
    %v442 = vld [vmem:[#allocation8 + $0x44] sm:$0xf]
    %v443 = vld [vmem:[#allocation8 + $0x48] sm:$0xf]
    %v444 = vld [vmem:[#allocation8 + $0x4c] sm:$0xf]
    %v445 = vld [vmem:[#allocation8 + $0x50] sm:$0xf]
    %v446 = vld [vmem:[#allocation8 + $0x54] sm:$0xf]
    %v447 = vld [vmem:[#allocation8 + $0x58] sm:$0xf]
    %v448 = vld [vmem:[#allocation8 + $0x5c] sm:$0xf]
    %v449 = vld [vmem:[#allocation8 + $0x60] sm:$0xf]
    %v450 = vld [vmem:[#allocation8 + $0x64] sm:$0xf]
    %v451 = vld [vmem:[#allocation8 + $0x68] sm:$0xf]
    %v452 = vld [vmem:[#allocation8 + $0x6c] sm:$0xf]
    %v453 = vld [vmem:[#allocation8 + $0x70] sm:$0xf]
    %v454 = vld [vmem:[#allocation8 + $0x74] sm:$0xf]
    %v455 = vld [vmem:[#allocation8 + $0x78] sm:$0xf]
    %v456 = vld [vmem:[#allocation8 + $0x7c] sm:$0xf]
    %v457 = vld [vmem:[#allocation8 + $0x80] sm:$0xf]
    %v458 = vld [vmem:[#allocation8 + $0x84] sm:$0xf]
    %v459 = vld [vmem:[#allocation8 + $0x88] sm:$0xf]
    %v460 = vld [vmem:[#allocation8 + $0x8c] sm:$0xf]
    %v461 = vld [vmem:[#allocation8 + $0x90] sm:$0xf]
    %v462 = vld [vmem:[#allocation8 + $0x94] sm:$0xf]
    %v463 = vld [vmem:[#allocation8 + $0x98] sm:$0xf]
    %v464 = vld [vmem:[#allocation8 + $0x9c] sm:$0xf]
    %v465 = vld [vmem:[#allocation8 + $0xa0] sm:$0xf]
    %v466 = vld [vmem:[#allocation8 + $0xa4] sm:$0xf]
    %v467 = vld [vmem:[#allocation8 + $0xa8] sm:$0xf]
    %v468 = vld [vmem:[#allocation8 + $0xac] sm:$0xf]
    %v469 = vld [vmem:[#allocation8 + $0xb0] sm:$0xf]
    %v470 = vld [vmem:[#allocation8 + $0xb4] sm:$0xf]
    %v471 = vld [vmem:[#allocation8 + $0xb8] sm:$0xf]
    %v472 = vld [vmem:[#allocation8 + $0xbc] sm:$0xf]
    %v473 = vld [vmem:[#allocation8 + $0xc0] sm:$0xf]
    %v474 = vld [vmem:[#allocation8 + $0xc4] sm:$0xf]
    %v475 = vld [vmem:[#allocation8 + $0xc8] sm:$0xf]
    %v476 = vld [vmem:[#allocation8 + $0xcc] sm:$0xf]
    %v477 = vld [vmem:[#allocation8 + $0xd0] sm:$0xf]
    %v478 = vld [vmem:[#allocation8 + $0xd4] sm:$0xf]
    %v479 = vld [vmem:[#allocation8 + $0xd8] sm:$0xf]
    %v480 = vld [vmem:[#allocation8 + $0xdc] sm:$0xf]
    %v481 = vld [vmem:[#allocation8 + $0xe0] sm:$0xf]
    %v482 = vld [vmem:[#allocation8 + $0xe4] sm:$0xf]
    %v483 = vld [vmem:[#allocation8 + $0xe8] sm:$0xf]
    %v484 = vld [vmem:[#allocation8 + $0xec] sm:$0xf]
    %v485 = vld [vmem:[#allocation8 + $0xf0] sm:$0xf]
    %v486 = vld [vmem:[#allocation8 + $0xf4] sm:$0xf]
    %v487 = vld [vmem:[#allocation8 + $0xf8] sm:$0xf]
    %v488 = vld [vmem:[#allocation8 + $0xfc] sm:$0xf]
    %v489 = vld [vmem:[%s4] sm:$0x1]
    %v491 = vlaneseq
    %v492 = vshrl.u32 %v491, 7
    %v493 = vsub.s32 0, %v492
    %v494 = vrot.slane %v489, %v493
    %v560 = vunpack.c.l.b16 %v425
    %v561 = vunpack.c.l.b16 %v426
    %v562 = vunpack.c.l.b16 %v427
    %v563 = vunpack.c.l.b16 %v428
    %v564 = vunpack.c.l.b16 %v429
    %v565 = vunpack.c.l.b16 %v430
    %v566 = vunpack.c.l.b16 %v431
    %v567 = vunpack.c.l.b16 %v432
    %v568 = vunpack.c.l.b16 %v433
    %v569 = vunpack.c.l.b16 %v434
    %v570 = vunpack.c.l.b16 %v435
    %v571 = vunpack.c.l.b16 %v436
    %v572 = vunpack.c.l.b16 %v437
    %v573 = vunpack.c.l.b16 %v438
    %v574 = vunpack.c.l.b16 %v439
    %v575 = vunpack.c.l.b16 %v440
    %v576 = vunpack.c.l.b16 %v441
    %v577 = vunpack.c.l.b16 %v442
    %v578 = vunpack.c.l.b16 %v443
    %v579 = vunpack.c.l.b16 %v444
    %v580 = vunpack.c.l.b16 %v445
    %v581 = vunpack.c.l.b16 %v446
    %v582 = vunpack.c.l.b16 %v447
    %v583 = vunpack.c.l.b16 %v448
    %v584 = vunpack.c.l.b16 %v449
    %v585 = vunpack.c.l.b16 %v450
    %v586 = vunpack.c.l.b16 %v451
    %v587 = vunpack.c.l.b16 %v452
    %v588 = vunpack.c.l.b16 %v453
    %v589 = vunpack.c.l.b16 %v454
    %v590 = vunpack.c.l.b16 %v455
    %v591 = vunpack.c.l.b16 %v456
    %v592 = vunpack.c.l.b16 %v457
    %v593 = vunpack.c.l.b16 %v458
    %v594 = vunpack.c.l.b16 %v459
    %v595 = vunpack.c.l.b16 %v460
    %v596 = vunpack.c.l.b16 %v461
    %v597 = vunpack.c.l.b16 %v462
    %v598 = vunpack.c.l.b16 %v463
    %v599 = vunpack.c.l.b16 %v464
    %v600 = vunpack.c.l.b16 %v465
    %v601 = vunpack.c.l.b16 %v466
    %v602 = vunpack.c.l.b16 %v467
    %v603 = vunpack.c.l.b16 %v468
    %v604 = vunpack.c.l.b16 %v469
    %v605 = vunpack.c.l.b16 %v470
    %v606 = vunpack.c.l.b16 %v471
    %v607 = vunpack.c.l.b16 %v472
    %v608 = vunpack.c.l.b16 %v473
    %v609 = vunpack.c.l.b16 %v474
    %v610 = vunpack.c.l.b16 %v475
    %v611 = vunpack.c.l.b16 %v476
    %v612 = vunpack.c.l.b16 %v477
    %v613 = vunpack.c.l.b16 %v478
    %v614 = vunpack.c.l.b16 %v479
    %v615 = vunpack.c.l.b16 %v480
    %v616 = vunpack.c.l.b16 %v481
    %v617 = vunpack.c.l.b16 %v482
    %v618 = vunpack.c.l.b16 %v483
    %v619 = vunpack.c.l.b16 %v484
    %v620 = vunpack.c.l.b16 %v485
    %v621 = vunpack.c.l.b16 %v486
    %v622 = vunpack.c.l.b16 %v487
    %v623 = vunpack.c.l.b16 %v488
    %v624 = vpack.c.b16 %v561, %v560
    %v625 = vpack.c.b16 %v563, %v562
    %v626 = vpack.c.b16 %v565, %v564
    %v627 = vpack.c.b16 %v567, %v566
    %v628 = vpack.c.b16 %v569, %v568
    %v629 = vpack.c.b16 %v571, %v570
    %v630 = vpack.c.b16 %v573, %v572
    %v631 = vpack.c.b16 %v575, %v574
    %v632 = vpack.c.b16 %v577, %v576
    %v633 = vpack.c.b16 %v579, %v578
    %v634 = vpack.c.b16 %v581, %v580
    %v635 = vpack.c.b16 %v583, %v582
    %v636 = vpack.c.b16 %v585, %v584
    %v637 = vpack.c.b16 %v587, %v586
    %v638 = vpack.c.b16 %v589, %v588
    %v639 = vpack.c.b16 %v591, %v590
    %v640 = vpack.c.b16 %v593, %v592
    %v641 = vpack.c.b16 %v595, %v594
    %v642 = vpack.c.b16 %v597, %v596
    %v643 = vpack.c.b16 %v599, %v598
    %v644 = vpack.c.b16 %v601, %v600
    %v645 = vpack.c.b16 %v603, %v602
    %v646 = vpack.c.b16 %v605, %v604
    %v647 = vpack.c.b16 %v607, %v606
    %v648 = vpack.c.b16 %v609, %v608
    %v649 = vpack.c.b16 %v611, %v610
    %v650 = vpack.c.b16 %v613, %v612
    %v651 = vpack.c.b16 %v615, %v614
    %v652 = vpack.c.b16 %v617, %v616
    %v653 = vpack.c.b16 %v619, %v618
    %v654 = vpack.c.b16 %v621, %v620
    %v655 = vpack.c.b16 %v623, %v622
    %688 = vmatprep.subr.bf16.mxu0 0
    %689 = vmatpush1.bf16.msra.mxu0 %v631
    %690 = vmatprep.subr.bf16.mxu0 0
    %691 = vmatpush1.bf16.msra.mxu0 %v630
    %692 = vmatprep.subr.bf16.mxu0 0
    %693 = vmatpush1.bf16.msra.mxu0 %v629
    %694 = vmatprep.subr.bf16.mxu0 0
    %695 = vmatpush1.bf16.msra.mxu0 %v628
    %696 = vmatprep.subr.bf16.mxu0 0
    %697 = vmatpush1.bf16.msra.mxu0 %v627
    %698 = vmatprep.subr.bf16.mxu0 0
    %699 = vmatpush1.bf16.msra.mxu0 %v626
    %700 = vmatprep.subr.bf16.mxu0 0
    %701 = vmatpush1.bf16.msra.mxu0 %v625
    %702 = vmatprep.subr.bf16.mxu0 0
    %703 = vmatpush1.bf16.msra.mxu0 %v624
    %704 = vmatprep.subr.bf16.mxu0 0
    %705 = vmatpush2.bf16.msra.mxu0 %v639
    %706 = vmatprep.subr.bf16.mxu0 0
    %707 = vmatpush2.bf16.msra.mxu0 %v638
    %708 = vmatprep.subr.bf16.mxu0 0
    %709 = vmatpush2.bf16.msra.mxu0 %v637
    %710 = vmatprep.subr.bf16.mxu0 0
    %711 = vmatpush2.bf16.msra.mxu0 %v636
    %712 = vmatprep.subr.bf16.mxu0 0
    %713 = vmatpush2.bf16.msra.mxu0 %v635
    %714 = vmatprep.subr.bf16.mxu0 0
    %715 = vmatpush2.bf16.msra.mxu0 %v634
    %716 = vmatprep.subr.bf16.mxu0 0
    %717 = vmatpush2.bf16.msra.mxu0 %v633
    %718 = vmatprep.subr.bf16.mxu0 0
    %719 = vmatpush2.bf16.msra.mxu0 %v632
    %720 = vmatprep.mubr.bf16.mxu0 %v418
    %721 = vmatmul.mubr.bf16.gmra.mxu0 %v417
    %v722 = vpop.f32.mrf.mxu0
    %v723 = vadd.f32 %v494, %v722
    %v724 = vpop.f32.mrf.mxu0
    %v725 = vpop.f32.mrf.mxu0
    %v726 = vadd.f32 %v494, %v725
    %v727 = vpop.f32.mrf.mxu0
    %728 = vmatprep.mubr.bf16.mxu0 %v422
    %729 = vmatmul.mubr.bf16.gmra.mxu0 %v421
    %v730 = vpop.f32.mrf.mxu0
    %v731 = vadd.f32 %v494, %v730
    %v732 = vpop.f32.mrf.mxu0
    %v733 = vpop.f32.mrf.mxu0
    %v734 = vadd.f32 %v494, %v733
    %v735 = vpop.f32.mrf.mxu0
    %736 = vdwg.mxu0
    %737 = vmatprep.subr.bf16.mxu0 0
    %738 = vmatpush1.bf16.msra.mxu0 %v647
    %739 = vmatprep.subr.bf16.mxu0 0
    %740 = vmatpush1.bf16.msra.mxu0 %v646
    %741 = vmatprep.subr.bf16.mxu0 0
    %742 = vmatpush1.bf16.msra.mxu0 %v645
    %743 = vmatprep.subr.bf16.mxu0 0
    %744 = vmatpush1.bf16.msra.mxu0 %v644
    %745 = vmatprep.subr.bf16.mxu0 0
    %746 = vmatpush1.bf16.msra.mxu0 %v643
    %747 = vmatprep.subr.bf16.mxu0 0
    %748 = vmatpush1.bf16.msra.mxu0 %v642
    %749 = vmatprep.subr.bf16.mxu0 0
    %750 = vmatpush1.bf16.msra.mxu0 %v641
    %751 = vmatprep.subr.bf16.mxu0 0
    %752 = vmatpush1.bf16.msra.mxu0 %v640
    %753 = vmatprep.subr.bf16.mxu0 0
    %754 = vmatpush2.bf16.msra.mxu0 %v655
    %755 = vmatprep.subr.bf16.mxu0 0
    %756 = vmatpush2.bf16.msra.mxu0 %v654
    %757 = vmatprep.subr.bf16.mxu0 0
    %758 = vmatpush2.bf16.msra.mxu0 %v653
    %759 = vmatprep.subr.bf16.mxu0 0
    %760 = vmatpush2.bf16.msra.mxu0 %v652
    %761 = vmatprep.subr.bf16.mxu0 0
    %762 = vmatpush2.bf16.msra.mxu0 %v651
    %763 = vmatprep.subr.bf16.mxu0 0
    %764 = vmatpush2.bf16.msra.mxu0 %v650
    %765 = vmatprep.subr.bf16.mxu0 0
    %766 = vmatpush2.bf16.msra.mxu0 %v649
    %767 = vmatprep.subr.bf16.mxu0 0
    %768 = vmatpush2.bf16.msra.mxu0 %v648
    %769 = vmatprep.mubr.bf16.mxu0 %v420
    %770 = vmatmul.mubr.bf16.gmra.mxu0 %v419
    %v771 = vpop.f32.mrf.mxu0
    %v772 = vadd.f32 %v723, %v771
    %v773 = vpop.f32.mrf.mxu0
    %v774 = vpop.f32.mrf.mxu0
    %v775 = vadd.f32 %v726, %v774
    %v776 = vpop.f32.mrf.mxu0
    %777 = vmatprep.mubr.bf16.mxu0 %v424
    %778 = vmatmul.mubr.bf16.gmra.mxu0 %v423
    %v779 = vpop.f32.mrf.mxu0
    %v780 = vadd.f32 %v731, %v779
    %v781 = vpop.f32.mrf.mxu0
    %v782 = vpop.f32.mrf.mxu0
    %v783 = vadd.f32 %v734, %v782
    %v784 = vpop.f32.mrf.mxu0
    %785 = vdwg.mxu0
    %786 = vst [vmem:[#allocation10] sm:$0xff] %v772
    %787 = vst [vmem:[#allocation10 + $0x8] sm:$0xff] %v775
    %788 = vst [vmem:[#allocation10 + $0x10] sm:$0xff] %v780
    %789 = vst [vmem:[#allocation10 + $0x18] sm:$0xff] %v783
    // Predicated region
    $region38: #{tpu_custom_call.1} parent=1 // pred_check
      _
    $region39: #{tpu_custom_call.1} parent=1 // pred_check_branch
      %791 = sbr.rel (0) target = $region41
    $region40: #{tpu_custom_call.1} parent=1 // pred_region
      %s793 = ssub.s32 512, 512
      %794 = vsyncadd [#allocation4], %s793
      %s795 = sshll.u32 [#allocation10], 4
      %s796 = int_to_ptr.vmem [resolvable:$true] %s795
      %801 = dma.vmem_to_hbm [thread:$0]  %s796, 512, %s5, [#allocation4], 128, 128, 8
    $region41: #{tpu_custom_call.1} parent=1 // pred_fallthru
      _
    // Predicated region
    $region42: #{tpu_custom_call.1} parent=1 // pred_check
      _
    $region43: #{tpu_custom_call.1} parent=1 // pred_check_branch
      %803 = sbr.rel (0) target = $region45
    $region44: #{tpu_custom_call.1} parent=1 // pred_region
      %804 = dma.done [#allocation4], 512
    $region45: #{tpu_custom_call.1} parent=1 // pred_fallthru
      _
    %805 = vsyncpa [#allocation3], 1
    %806 = vsyncpa [#allocation6], 1
    %807 = vsyncpa [#allocation9], 1
    %808 = vsyncpa [#allocation4], 1

</llo_original>
